<compile_context>
chip_gen: v7x
topology: tpu7x:2x2x1
jax: 0.10.0
libtpu: 0.0.40
codegen_flags: <defaults>
</compile_context>

<pallas_src>
import jax
import jax.numpy as jnp
from jax.experimental import pallas as pl
from jax.experimental.pallas import tpu as pltpu

_EPS = 1e-5
_ROW_ALIGN = 16      # sublane alignment safe for both f32 and bf16 blocks
_LANE = 128


def _round_up(a, b):
    return (a + b - 1) // b * b


def _chip_defaults():
    """(vmem_limit_bytes, fused_bytes_limit) per TPU generation."""
    try:
        kind = jax.devices()[0].device_kind.lower()
    except Exception:
        kind = ""
    if "v7" in kind:
        # 64 MiB physical VMEM per TC and 2 TCs per chip: keep the fused
        # (grid=(1,), single-core) threshold low so mid-size problems take the
        # "parallel" tiled path and use both TensorCores.
        return 48 << 20, 4 << 20
    if "v5 lite" in kind or "v5e" in kind:
        # 128 MiB VMEM but only 1 vst slot / weaker MXU: moderate fused limit.
        return 64 << 20, 12 << 20
    if kind:  # v6e / v5p / v4 ...: 128 MiB physical VMEM
        return 64 << 20, 24 << 20
    return 32 << 20, 16 << 20  # unknown backend: stay conservative


# ---------------------------------------------------------------------------
# Path 1: small problems -- single fused invocation (matmul + BatchNorm).
# ---------------------------------------------------------------------------
def _fused_kernel(x_ref, w_ref, gamma_ref, beta_ref, o_ref):
    # Linear (bias dropped: a per-feature constant is exactly cancelled by the
    # training-mode BatchNorm mean subtraction).
    h = jnp.dot(x_ref[...], w_ref[...], preferred_element_type=jnp.float32)
    # BatchNorm1dNode: batch statistics over the node axis, biased variance.
    mean = jnp.mean(h, axis=0, keepdims=True)                    # (1, H)
    var = jnp.mean((h - mean) * (h - mean), axis=0, keepdims=True)
    scale = jax.lax.rsqrt(var + _EPS) * gamma_ref[...]           # fold gamma
    shift = beta_ref[...] - mean * scale
    o_ref[...] = (h * scale + shift).astype(o_ref.dtype)


def _fused_call(x, w, g2, b2, out_dtype, vmem_limit_bytes):
    N, D_in = x.shape
    Hp = w.shape[1]
    cost = pl.CostEstimate(
        flops=2 * N * D_in * Hp + 8 * N * Hp,
        transcendentals=Hp,
        bytes_accessed=(N * D_in * x.dtype.itemsize
                        + D_in * Hp * w.dtype.itemsize
                        + N * Hp * out_dtype.itemsize + 2 * Hp * 4))
    return pl.pallas_call(
        _fused_kernel,
        out_shape=jax.ShapeDtypeStruct((N, Hp), out_dtype),
        grid_spec=pltpu.PrefetchScalarGridSpec(
            num_scalar_prefetch=0,
            grid=(1,),
            in_specs=[
                pl.BlockSpec((N, D_in), lambda i: (0, 0)),
                pl.BlockSpec((D_in, Hp), lambda i: (0, 0)),
                pl.BlockSpec((1, Hp), lambda i: (0, 0)),
                pl.BlockSpec((1, Hp), lambda i: (0, 0)),
            ],
            out_specs=pl.BlockSpec((N, Hp), lambda i: (0, 0)),
        ),
        compiler_params=pltpu.CompilerParams(
            dimension_semantics=("arbitrary",),
            vmem_limit_bytes=vmem_limit_bytes),
        cost_estimate=cost,
    )(x, w, g2, b2)


# ---------------------------------------------------------------------------
# Path 2: tiled two-pass (scales in N; BN stats via per-tile partial sums).
# ---------------------------------------------------------------------------
def _matmul_stats_kernel(x_ref, w_ref, h_ref, s_ref, ss_ref):
    # One dot over the full K axis: the weight block is VMEM-resident for the
    # whole grid (constant index_map), so there is no accumulator
    # read-modify-write through VMEM and no per-K grid-step overhead.
    h = jnp.dot(x_ref[...], w_ref[...], preferred_element_type=jnp.float32)
    # Per-tile statistics in f32 (before any downcast of h), stored as two
    # separate lane-dense rows (no concat / relayout copy in the tile tail).
    s_ref[...] = jnp.sum(h, axis=0, keepdims=True)
    ss_ref[...] = jnp.sum(h * h, axis=0, keepdims=True)
    h_ref[...] = h.astype(h_ref.dtype)


def _bn_apply_kernel(h_ref, scale_ref, shift_ref, o_ref):
    o_ref[...] = (h_ref[...].astype(jnp.float32) * scale_ref[...]
                  + shift_ref[...]).astype(o_ref.dtype)


def _tiled_call(x, w, g2, b2, out_dtype, h_dtype, tm_req, pass2_rows,
                vmem_limit_bytes):
    N, D_in = x.shape            # true node count (before padding)
    Hp = w.shape[1]
    x_b, w_b = x.dtype.itemsize, w.dtype.itemsize
    h_b, o_b = jnp.dtype(h_dtype).itemsize, out_dtype.itemsize

    budget = int(vmem_limit_bytes * 0.75)      # leave double-buffer headroom
    w_resident = 2 * D_in * Hp * w_b
    if w_resident > budget:
        # TODO(synk): add a K-grid-tiled fallback for weights too large to
        # keep resident in VMEM (not needed for typical dim_in x dim_inner).
        raise NotImplementedError("node_encoder weight does not fit in VMEM")

    # Pass-1 row tile: double-buffered x block + resident w + h/stats blocks.
    per_row1 = 2 * D_in * x_b + 2 * Hp * h_b + Hp * 4
    tm_max = max(_ROW_ALIGN,
                 (budget - w_resident) // per_row1 // _ROW_ALIGN * _ROW_ALIGN)
    tm = max(_ROW_ALIGN, min(_round_up(tm_req, _ROW_ALIGN), tm_max,
                             _round_up(N, _ROW_ALIGN)))

    # Pass-2 row tile: pure memory-bound elementwise -> as large as fits
    # (decoupled from pass 1; big tiles reach ~85% of the HBM roofline).
    per_row2 = 2 * Hp * (h_b + o_b + 4)
    m2 = max(1, min(pass2_rows // tm,
                    max(1, budget // (per_row2 * tm)),
                    -(-N // tm),               # don't over-pad small N
                    8))
    tm2 = tm * m2

    Np = _round_up(N, tm2)
    if Np != N:
        # Zero-padded rows give h == 0 (no Linear bias), contributing nothing
        # to sum / sum_sq; statistics are divided by the true N below.
        x = jnp.pad(x, ((0, Np - N), (0, 0)))

    n1, n2 = Np // tm, Np // tm2

    # ---- pass 1: tiled matmul + per-N-tile partial feature statistics ------
    cost1 = pl.CostEstimate(
        flops=2 * Np * D_in * Hp + 3 * Np * Hp,
        transcendentals=0,
        bytes_accessed=(Np * D_in * x_b + D_in * Hp * w_b
                        + Np * Hp * h_b + 2 * n1 * Hp * 4))
    h, s, ss = pl.pallas_call(
        _matmul_stats_kernel,
        out_shape=(jax.ShapeDtypeStruct((Np, Hp), h_dtype),
                   jax.ShapeDtypeStruct((n1, Hp), jnp.float32),
                   jax.ShapeDtypeStruct((n1, Hp), jnp.float32)),
        grid_spec=pltpu.PrefetchScalarGridSpec(
            num_scalar_prefetch=0,
            grid=(n1,),
            in_specs=[
                pl.BlockSpec((tm, D_in), lambda i: (i, 0)),
                pl.BlockSpec((D_in, Hp), lambda i: (0, 0)),   # fetched once
            ],
            out_specs=(
                pl.BlockSpec((tm, Hp), lambda i: (i, 0)),
                pl.BlockSpec((1, Hp), lambda i: (i, 0)),
                pl.BlockSpec((1, Hp), lambda i: (i, 0)),
            ),
        ),
        compiler_params=pltpu.CompilerParams(
            dimension_semantics=("parallel",),
            vmem_limit_bytes=vmem_limit_bytes),
        cost_estimate=cost1,
    )(x, w)

    # ---- tiny (H,)-sized stats combine + gamma folding in plain JAX --------
    inv_n = 1.0 / jnp.float32(N)
    mean = jnp.sum(s, axis=0) * inv_n
    # TODO(synk): E[h^2] - mean^2 can lose precision when |mean| >> std; a
    # shifted / Chan-style per-tile combine would be more robust there.
    var = jnp.maximum(jnp.sum(ss, axis=0) * inv_n - mean * mean, 0.0)
    scale = (g2[0] * jax.lax.rsqrt(var + _EPS)).reshape(1, Hp)
    shift = (b2[0] - mean * scale[0]).reshape(1, Hp)

    # ---- pass 2: y = h * scale + shift (large, decoupled tiles) ------------
    cost2 = pl.CostEstimate(
        flops=2 * Np * Hp, transcendentals=0,
        bytes_accessed=Np * Hp * (h_b + o_b) + 2 * Hp * 4)
    return pl.pallas_call(
        _bn_apply_kernel,
        out_shape=jax.ShapeDtypeStruct((Np, Hp), out_dtype),
        grid_spec=pltpu.PrefetchScalarGridSpec(
            num_scalar_prefetch=0,
            grid=(n2,),
            in_specs=[
                pl.BlockSpec((tm2, Hp), lambda i: (i, 0)),
                pl.BlockSpec((1, Hp), lambda i: (0, 0)),
                pl.BlockSpec((1, Hp), lambda i: (0, 0)),
            ],
            out_specs=pl.BlockSpec((tm2, Hp), lambda i: (i, 0)),
        ),
        compiler_params=pltpu.CompilerParams(
            dimension_semantics=("parallel",),
            vmem_limit_bytes=vmem_limit_bytes),
        cost_estimate=cost2,
    )(h, scale, shift)


# ---------------------------------------------------------------------------
# Public wrapper: FeatureEncoder forward (Linear node_encoder + BatchNorm1dNode)
# ---------------------------------------------------------------------------
def feature_encoder(x, w, gamma, beta, *, tm=512, pass2_rows=2048,
                    mxu_dtype=None, h_dtype=jnp.float32, out_dtype=None,
                    tiled=None, fused_bytes_limit=None, vmem_limit_bytes=None):
    """x: (N, D_in) node features; w: (D_in, H) node_encoder weight
    (H = cfg.gnn.dim_inner); gamma/beta: (H,) BN affine parameters.

    mxu_dtype=jnp.bfloat16 runs the MXU in bf16 with f32 accumulation (native
    MXU input on v5e/v6e/v7x; pass bf16 x/w directly to avoid the wrapper
    cast's extra HBM pass).  h_dtype=jnp.bfloat16 stores the tiled path's
    intermediate in bf16 (stats still computed in f32).  The Linear bias is
    omitted: it is exactly cancelled by the training-mode BatchNorm mean."""
    N, D_in = x.shape
    H = w.shape[1]
    out_dtype = jnp.dtype(out_dtype) if out_dtype is not None else jnp.dtype(x.dtype)

    default_vmem, default_fused = _chip_defaults()
    if vmem_limit_bytes is None:
        vmem_limit_bytes = default_vmem
    if fused_bytes_limit is None:
        fused_bytes_limit = default_fused

    if mxu_dtype is not None:
        if x.dtype != jnp.dtype(mxu_dtype):
            x = x.astype(mxu_dtype)
        if w.dtype != jnp.dtype(mxu_dtype):
            w = w.astype(mxu_dtype)

    # Pad H (the lane dimension of every block) to a multiple of 128 so all
    # stores are lane-dense (no masked vst.msk) and MXU columns are not wasted.
    Hp = _round_up(H, _LANE)
    if Hp != H:
        w = jnp.pad(w, ((0, 0), (0, Hp - H)))
        gamma = jnp.pad(gamma, (0, Hp - H))
        beta = jnp.pad(beta, (0, Hp - H))

    g2 = gamma.reshape(1, Hp).astype(jnp.float32)
    b2 = beta.reshape(1, Hp).astype(jnp.float32)

    if tiled is None:
        # Auto: single-shot while x, w, h, out fit comfortably (chip-aware).
        footprint = (N * D_in * x.dtype.itemsize + D_in * Hp * w.dtype.itemsize
                     + N * Hp * (4 + out_dtype.itemsize))
        tiled = footprint > fused_bytes_limit

    if not tiled:
        out = _fused_call(x, w, g2, b2, out_dtype, vmem_limit_bytes)
    else:
        out = _tiled_call(x, w, g2, b2, out_dtype, jnp.dtype(h_dtype),
                          tm, pass2_rows, vmem_limit_bytes)

    if out.shape != (N, H):
        out = out[:N, :H]
    return out


# ---------------------------------------------------------------------------
# Pure-JAX reference (includes the Linear bias, which the kernel drops since
# it is mathematically cancelled by the training-mode BatchNorm).
# ---------------------------------------------------------------------------
def feature_encoder_ref(x, w, b, gamma, beta, mxu_dtype=None, eps=_EPS):
    if mxu_dtype is not None:
        h = jnp.dot(x.astype(mxu_dtype), w.astype(mxu_dtype),
                    preferred_element_type=jnp.float32)
    else:
        h = jnp.dot(x, w, preferred_element_type=jnp.float32)
    h = h + b[None, :]
    mean = jnp.mean(h, axis=0, keepdims=True)
    var = jnp.mean((h - mean) ** 2, axis=0, keepdims=True)
    return (h - mean) * jax.lax.rsqrt(var + eps) * gamma[None, :] + beta[None, :]


if __name__ == "__main__":
    # --- Test 1: small problem -> single fused kernel (f32 MXU). -----------
    N, D_IN, H = 64, 256, 128
    k1, k2, k3, k4, k5 = jax.random.split(jax.random.PRNGKey(0), 5)
    x = jax.random.normal(k1, (N, D_IN), dtype=jnp.float32)
    w = jax.random.normal(k2, (D_IN, H), dtype=jnp.float32) * 0.02
    b = jax.random.normal(k3, (H,), dtype=jnp.float32) * 0.01
    gamma = jnp.ones((H,), jnp.float32) + 0.1 * jax.random.normal(k4, (H,))
    beta = 0.1 * jax.random.normal(k5, (H,), dtype=jnp.float32)

    out = jax.block_until_ready(feature_encoder(x, w, gamma, beta))
    ref = feature_encoder_ref(x, w, b, gamma, beta)
    assert out.shape == ref.shape
    assert jnp.allclose(out, ref, atol=1e-4, rtol=1e-4), "fused path mismatch"

    # --- Test 2: tiled two-pass, bf16 MXU inputs + bf16 intermediate h. ----
    N2, D2 = 512, 512
    j1, j2, j3, j4, j5 = jax.random.split(jax.random.PRNGKey(1), 5)
    x2 = jax.random.normal(j1, (N2, D2), dtype=jnp.float32)
    w2 = jax.random.normal(j2, (D2, H), dtype=jnp.float32) * 0.02
    b2_ = jax.random.normal(j3, (H,), dtype=jnp.float32) * 0.01
    gamma2 = jnp.ones((H,), jnp.float32) + 0.1 * jax.random.normal(j4, (H,))
    beta2 = 0.1 * jax.random.normal(j5, (H,), dtype=jnp.float32)

    out2 = jax.block_until_ready(
        feature_encoder(x2, w2, gamma2, beta2, tm=128, tiled=True,
                        mxu_dtype=jnp.bfloat16, h_dtype=jnp.bfloat16))
    ref2 = feature_encoder_ref(x2, w2, b2_, gamma2, beta2,
                               mxu_dtype=jnp.bfloat16)
    assert jnp.allclose(out2, ref2, atol=2e-2, rtol=2e-2), \
        "tiled bf16 path mismatch"

    # --- Test 3: tiled path with arbitrary N / D_in / H (padding path). ----
    N3, D3, H3 = 300, 200, 96
    i1, i2, i3, i4, i5 = jax.random.split(jax.random.PRNGKey(2), 5)
    x3 = jax.random.normal(i1, (N3, D3), dtype=jnp.float32)
    w3 = jax.random.normal(i2, (D3, H3), dtype=jnp.float32) * 0.02
    b3_ = jax.random.normal(i3, (H3,), dtype=jnp.float32) * 0.01
    gamma3 = jnp.ones((H3,), jnp.float32) + 0.1 * jax.random.normal(i4, (H3,))
    beta3 = 0.1 * jax.random.normal(i5, (H3,), dtype=jnp.float32)

    out3 = jax.block_until_ready(
        feature_encoder(x3, w3, gamma3, beta3, tm=128, tiled=True))
    ref3 = feature_encoder_ref(x3, w3, b3_, gamma3, beta3)
    assert out3.shape == (N3, H3)
    assert jnp.allclose(out3, ref3, atol=5e-4, rtol=5e-4), \
        "padded tiled path mismatch"

    # TODO(synk): the registry NodeEncoder could also be an embedding-table
    # encoder (e.g. Hetero_SDPE); only the Linear+BN path is implemented, and
    # BN running-stat (inference/eval-mode) tracking is not modeled.
    print("KERNEL_OK")
</pallas_src>

<mosaic_0001>
module attributes {stable_mosaic.version = 11 : i64} {
  func.func @_fused_kernel(%arg0: i32, %arg1: memref<64x256xf32, #tpu.memory_space<vmem>>, %arg2: memref<256x128xf32, #tpu.memory_space<vmem>>, %arg3: memref<1x128xf32, #tpu.memory_space<vmem>>, %arg4: memref<1x128xf32, #tpu.memory_space<vmem>>, %arg5: memref<64x128xf32, #tpu.memory_space<vmem>>) attributes {dimension_semantics = [#tpu.dimension_semantics<arbitrary>], iteration_bounds = array<i64: 1>, scalar_prefetch = 0 : i64, scratch_operands = 0 : i64, tpu.core_type = #tpu.core_type<tc>, window_params = [{pipeline_mode = #tpu.pipeline_mode<synchronous>, transform_indices = @transform_0, window_bounds = array<i64: 64, 256>}, {pipeline_mode = #tpu.pipeline_mode<synchronous>, transform_indices = @transform_1, window_bounds = array<i64: 256, 128>}, {pipeline_mode = #tpu.pipeline_mode<synchronous>, transform_indices = @transform_2, window_bounds = array<i64: 1, 128>}, {pipeline_mode = #tpu.pipeline_mode<synchronous>, transform_indices = @transform_3, window_bounds = array<i64: 1, 128>}, {pipeline_mode = #tpu.pipeline_mode<synchronous>, transform_indices = @transform_4, window_bounds = array<i64: 64, 128>}]} {
    %c0 = arith.constant 0 : index
    %c0_0 = arith.constant 0 : index
    %0 = vector.load %arg1[%c0, %c0_0] : memref<64x256xf32, #tpu.memory_space<vmem>>, vector<64x256xf32>
    %c0_1 = arith.constant 0 : index
    %c0_2 = arith.constant 0 : index
    %1 = vector.load %arg2[%c0_1, %c0_2] : memref<256x128xf32, #tpu.memory_space<vmem>>, vector<256x128xf32>
    %cst = arith.constant dense<0.000000e+00> : vector<64x128xf32>
    %2 = tpu.matmul %0, %1, %cst {dimension_numbers = #tpu.dot_dimension_numbers<[1], [0], [0], [1], [0, 0, 1, 1], [], []>} : vector<64x256xf32>, vector<256x128xf32>, vector<64x128xf32> -> vector<64x128xf32>
    %cst_3 = arith.constant dense<0.000000e+00> : vector<128xf32>
    %3 = vector.multi_reduction <add>, %2, %cst_3 [0] : vector<64x128xf32> to vector<128xf32>
    %4 = vector.shape_cast %3 : vector<128xf32> to vector<1x128xf32>
    %cst_4 = arith.constant 6.400000e+01 : f32
    %5 = vector.broadcast %cst_4 : f32 to vector<1x128xf32>
    %6 = arith.divf %4, %5 : vector<1x128xf32>
    %7 = vector.broadcast %6 : vector<1x128xf32> to vector<64x128xf32>
    %8 = arith.subf %2, %7 : vector<64x128xf32>
    %9 = vector.broadcast %6 : vector<1x128xf32> to vector<64x128xf32>
    %10 = arith.subf %2, %9 : vector<64x128xf32>
    %11 = arith.mulf %8, %10 : vector<64x128xf32>
    %cst_5 = arith.constant dense<0.000000e+00> : vector<128xf32>
    %12 = vector.multi_reduction <add>, %11, %cst_5 [0] : vector<64x128xf32> to vector<128xf32>
    %13 = vector.shape_cast %12 : vector<128xf32> to vector<1x128xf32>
    %cst_6 = arith.constant 6.400000e+01 : f32
    %14 = vector.broadcast %cst_6 : f32 to vector<1x128xf32>
    %15 = arith.divf %13, %14 : vector<1x128xf32>
    %cst_7 = arith.constant 9.99999974E-6 : f32
    %16 = vector.broadcast %cst_7 : f32 to vector<1x128xf32>
    %17 = arith.addf %15, %16 : vector<1x128xf32>
    %18 = math.rsqrt %17 : vector<1x128xf32>
    %c0_8 = arith.constant 0 : index
    %c0_9 = arith.constant 0 : index
    %19 = vector.load %arg3[%c0_8, %c0_9] : memref<1x128xf32, #tpu.memory_space<vmem>>, vector<1x128xf32>
    %20 = arith.mulf %18, %19 : vector<1x128xf32>
    %c0_10 = arith.constant 0 : index
    %c0_11 = arith.constant 0 : index
    %21 = vector.load %arg4[%c0_10, %c0_11] : memref<1x128xf32, #tpu.memory_space<vmem>>, vector<1x128xf32>
    %22 = arith.mulf %6, %20 : vector<1x128xf32>
    %23 = arith.subf %21, %22 : vector<1x128xf32>
    %24 = vector.broadcast %20 : vector<1x128xf32> to vector<64x128xf32>
    %25 = arith.mulf %2, %24 : vector<64x128xf32>
    %26 = vector.broadcast %23 : vector<1x128xf32> to vector<64x128xf32>
    %27 = arith.addf %25, %26 : vector<64x128xf32>
    %c0_12 = arith.constant 0 : index
    %c0_13 = arith.constant 0 : index
    %28 = vector.load %arg5[%c0_12, %c0_13] : memref<64x128xf32, #tpu.memory_space<vmem>>, vector<64x128xf32>
    tpu.vector_store %arg5[%c0_12, %c0_13], %27 {strides = array<i32>} : memref<64x128xf32, #tpu.memory_space<vmem>>, vector<64x128xf32>,
    return
  }
  func.func @transform_0(%arg0: i32) -> (i32, i32) {
    %c0_i32 = arith.constant 0 : i32
    %c0_i32_0 = arith.constant 0 : i32
    %c0_i32_1 = arith.constant 0 : i32
    return %c0_i32, %c0_i32_0 : i32, i32
  }
  func.func @transform_1(%arg0: i32) -> (i32, i32) {
    %c0_i32 = arith.constant 0 : i32
    %c0_i32_0 = arith.constant 0 : i32
    %c0_i32_1 = arith.constant 0 : i32
    return %c0_i32, %c0_i32_0 : i32, i32
  }
  func.func @transform_2(%arg0: i32) -> (i32, i32) {
    %c0_i32 = arith.constant 0 : i32
    %c0_i32_0 = arith.constant 0 : i32
    %c0_i32_1 = arith.constant 0 : i32
    return %c0_i32, %c0_i32_0 : i32, i32
  }
  func.func @transform_3(%arg0: i32) -> (i32, i32) {
    %c0_i32 = arith.constant 0 : i32
    %c0_i32_0 = arith.constant 0 : i32
    %c0_i32_1 = arith.constant 0 : i32
    return %c0_i32, %c0_i32_0 : i32, i32
  }
  func.func @transform_4(%arg0: i32) -> (i32, i32) {
    %c0_i32 = arith.constant 0 : i32
    %c0_i32_0 = arith.constant 0 : i32
    %c0_i32_1 = arith.constant 0 : i32
    return %c0_i32, %c0_i32_0 : i32, i32
  }
}

</mosaic_0001>

<llo_original>
// kernel: tpu_custom_call.1
$region0: #{tpu_custom_call.1}
  #allocation0 [shape = 'u32[]', space=smem, size = 0x4, offset = 0x4, fixed_abs, tag = 'smem constant byte address 0x4 - core index']
  #allocation1 [shape = 'u32[144,128]{1,0:T(1,128)}', space=vmem, size = 0x12000, scoped, tag = 'internal scratch']
  %s0 = inlined_call_operand.hbm [shape: f32[64,256], index: 0, kind: input, shape index: {}]
  %s1 = inlined_call_operand.hbm [shape: f32[256,128], index: 1, kind: input, shape index: {}]
  %s2 = inlined_call_operand.hbm [shape: f32[1,128], index: 2, kind: input, shape index: {}]
  %s3 = inlined_call_operand.hbm [shape: f32[1,128], index: 3, kind: input, shape index: {}]
  %s4 = inlined_call_operand.hbm [shape: f32[64,128], index: 4, kind: output, shape index: {}]
  %s5 = sld [smem:[#allocation0]]
  $region42: #{tpu_custom_call.1} parent=0
    _
  %s7 = ssub.s32 1, %s5
  %s8 = scalar_select 0, %s7, %s5
  $region1: #{tpu_custom_call.1} parent=0
    #allocation2 [shape = 'u8[65536]{0}', space=vmem, size = 0x10000, scoped, tag = 'input window, operand 0, single buffered']
    #allocation3 [shape = 's32[1]{0}', space=sflag, size = 0x4, scoped, tag = 'scoped memory for tpu_custom_call.1']
    #allocation4 [shape = 's32[1]{0}', space=sflag, size = 0x4, scoped, tag = 'scoped memory for tpu_custom_call.1']
    #allocation5 [shape = 'u8[131072]{0}', space=vmem, size = 0x20000, scoped, tag = 'input window, operand 1, single buffered']
    #allocation6 [shape = 's32[1]{0}', space=sflag, size = 0x4, scoped, tag = 'scoped memory for tpu_custom_call.1']
    #allocation7 [shape = 'u8[512]{0}', space=vmem, size = 0x400, scoped, tag = 'input window, operand 2, single buffered']
    #allocation8 [shape = 'u8[512]{0}', space=vmem, size = 0x400, scoped, tag = 'input window, operand 3, single buffered']
    #allocation9 [shape = 's32[1]{0}', space=sflag, size = 0x4, scoped, tag = 'scoped memory for tpu_custom_call.1']
    #allocation10 [shape = 'u8[32768]{0}', space=vmem, size = 0x8000, scoped, tag = 'output window, operand 0, single buffered']
    %9 = vsyncpa [#allocation3], 0
    %10 = vsyncpa [#allocation6], 0
    %11 = vsyncpa [#allocation9], 0
    %12 = vsyncpa [#allocation4], 0
    // Predicated region
    $region2: #{tpu_custom_call.1} parent=1 // pred_check
      _
    $region3: #{tpu_custom_call.1} parent=1 // pred_check_branch
      %14 = sbr.rel (0) target = $region5
    $region4: #{tpu_custom_call.1} parent=1 // pred_region
      %s16 = ssub.s32 2048, 2048
      %17 = vsyncadd [#allocation3], %s16
      %s18 = sshll.u32 [#allocation2], 4
      %s19 = int_to_ptr.vmem [resolvable:$true] %s18
      %24 = dma.hbm_to_vmem [thread:$0]  %s0, 2048, %s19, [#allocation3], 256, 256, 16
    $region5: #{tpu_custom_call.1} parent=1 // pred_fallthru
      _
    // Predicated region
    $region6: #{tpu_custom_call.1} parent=1 // pred_check
      _
    $region7: #{tpu_custom_call.1} parent=1 // pred_check_branch
      %26 = sbr.rel (0) target = $region9
    $region8: #{tpu_custom_call.1} parent=1 // pred_region
      %s28 = ssub.s32 4096, 4096
      %29 = vsyncadd [#allocation6], %s28
      %s30 = sshll.u32 [#allocation5], 4
      %s31 = int_to_ptr.vmem [resolvable:$true] %s30
      %36 = dma.hbm_to_vmem [thread:$0]  %s1, 4096, %s31, [#allocation6], 128, 128, 8
    $region9: #{tpu_custom_call.1} parent=1 // pred_fallthru
      _
    // Predicated region
    $region10: #{tpu_custom_call.1} parent=1 // pred_check
      _
    $region11: #{tpu_custom_call.1} parent=1 // pred_check_branch
      %38 = sbr.rel (0) target = $region13
    $region12: #{tpu_custom_call.1} parent=1 // pred_region
      %s40 = ssub.s32 16, 16
      %41 = vsyncadd [#allocation6], %s40
      %s43 = sshll.u32 [#allocation7], 4
      %s44 = int_to_ptr.vmem [resolvable:$true] %s43
      %46 = dma.hbm_to_vmem [thread:$0]  %s2, 16, %s44, [#allocation6]
    $region13: #{tpu_custom_call.1} parent=1 // pred_fallthru
      _
    // Predicated region
    $region14: #{tpu_custom_call.1} parent=1 // pred_check
      _
    $region15: #{tpu_custom_call.1} parent=1 // pred_check_branch
      %48 = sbr.rel (0) target = $region17
    $region16: #{tpu_custom_call.1} parent=1 // pred_region
      %s50 = ssub.s32 16, 16
      %51 = vsyncadd [#allocation9], %s50
      %s53 = sshll.u32 [#allocation8], 4
      %s54 = int_to_ptr.vmem [resolvable:$true] %s53
      %56 = dma.hbm_to_vmem [thread:$0]  %s3, 16, %s54, [#allocation9]
    $region17: #{tpu_custom_call.1} parent=1 // pred_fallthru
      _
    // Predicated region
    $region18: #{tpu_custom_call.1} parent=1 // pred_check
      _
    $region19: #{tpu_custom_call.1} parent=1 // pred_check_branch
      %58 = sbr.rel (0) target = $region21
    $region20: #{tpu_custom_call.1} parent=1 // pred_region
      %59 = dma.done [#allocation3], 2048
    $region21: #{tpu_custom_call.1} parent=1 // pred_fallthru
      _
    // Predicated region
    $region22: #{tpu_custom_call.1} parent=1 // pred_check
      _
    $region23: #{tpu_custom_call.1} parent=1 // pred_check_branch
      %61 = sbr.rel (0) target = $region25
    $region24: #{tpu_custom_call.1} parent=1 // pred_region
      %62 = dma.done [#allocation6], 4096
    $region25: #{tpu_custom_call.1} parent=1 // pred_fallthru
      _
    // Predicated region
    $region26: #{tpu_custom_call.1} parent=1 // pred_check
      _
    $region27: #{tpu_custom_call.1} parent=1 // pred_check_branch
      %64 = sbr.rel (0) target = $region29
    $region28: #{tpu_custom_call.1} parent=1 // pred_region
      %65 = dma.done [#allocation6], 16
    $region29: #{tpu_custom_call.1} parent=1 // pred_fallthru
      _
    // Predicated region
    $region30: #{tpu_custom_call.1} parent=1 // pred_check
      _
    $region31: #{tpu_custom_call.1} parent=1 // pred_check_branch
      %67 = sbr.rel (0) target = $region33
    $region32: #{tpu_custom_call.1} parent=1 // pred_region
      %68 = dma.done [#allocation9], 16
    $region33: #{tpu_custom_call.1} parent=1 // pred_fallthru
      _
    %v69 = vld [vmem:[#allocation2] sm:$0xff]
    %v70 = vld [vmem:[#allocation2 + $0x8] sm:$0xff]
    %v71 = vld [vmem:[#allocation2 + $0x10] sm:$0xff]
    %v72 = vld [vmem:[#allocation2 + $0x18] sm:$0xff]
    %v73 = vld [vmem:[#allocation2 + $0x20] sm:$0xff]
    %v74 = vld [vmem:[#allocation2 + $0x28] sm:$0xff]
    %v75 = vld [vmem:[#allocation2 + $0x30] sm:$0xff]
    %v76 = vld [vmem:[#allocation2 + $0x38] sm:$0xff]
    %v77 = vld [vmem:[#allocation2 + $0x40] sm:$0xff]
    %v78 = vld [vmem:[#allocation2 + $0x48] sm:$0xff]
    %v79 = vld [vmem:[#allocation2 + $0x50] sm:$0xff]
    %v80 = vld [vmem:[#allocation2 + $0x58] sm:$0xff]
    %v81 = vld [vmem:[#allocation2 + $0x60] sm:$0xff]
    %v82 = vld [vmem:[#allocation2 + $0x68] sm:$0xff]
    %v83 = vld [vmem:[#allocation2 + $0x70] sm:$0xff]
    %v84 = vld [vmem:[#allocation2 + $0x78] sm:$0xff]
    %v85 = vld [vmem:[#allocation5] sm:$0xff]
    %v86 = vld [vmem:[#allocation5 + $0x8] sm:$0xff]
    %v87 = vld [vmem:[#allocation5 + $0x10] sm:$0xff]
    %v88 = vld [vmem:[#allocation5 + $0x18] sm:$0xff]
    %v89 = vld [vmem:[#allocation5 + $0x20] sm:$0xff]
    %v90 = vld [vmem:[#allocation5 + $0x28] sm:$0xff]
    %v91 = vld [vmem:[#allocation5 + $0x30] sm:$0xff]
    %v92 = vld [vmem:[#allocation5 + $0x38] sm:$0xff]
    %v93 = vld [vmem:[#allocation5 + $0x40] sm:$0xff]
    %v94 = vld [vmem:[#allocation5 + $0x48] sm:$0xff]
    %v95 = vld [vmem:[#allocation5 + $0x50] sm:$0xff]
    %v96 = vld [vmem:[#allocation5 + $0x58] sm:$0xff]
    %v97 = vld [vmem:[#allocation5 + $0x60] sm:$0xff]
    %v98 = vld [vmem:[#allocation5 + $0x68] sm:$0xff]
    %v99 = vld [vmem:[#allocation5 + $0x70] sm:$0xff]
    %v100 = vld [vmem:[#allocation5 + $0x78] sm:$0xff]
    %v101 = vld [vmem:[#allocation5 + $0x80] sm:$0xff]
    %v102 = vld [vmem:[#allocation5 + $0x88] sm:$0xff]
    %v103 = vld [vmem:[#allocation5 + $0x90] sm:$0xff]
    %v104 = vld [vmem:[#allocation5 + $0x98] sm:$0xff]
    %v105 = vld [vmem:[#allocation5 + $0xa0] sm:$0xff]
    %v106 = vld [vmem:[#allocation5 + $0xa8] sm:$0xff]
    %v107 = vld [vmem:[#allocation5 + $0xb0] sm:$0xff]
    %v108 = vld [vmem:[#allocation5 + $0xb8] sm:$0xff]
    %v109 = vld [vmem:[#allocation5 + $0xc0] sm:$0xff]
    %v110 = vld [vmem:[#allocation5 + $0xc8] sm:$0xff]
    %v111 = vld [vmem:[#allocation5 + $0xd0] sm:$0xff]
    %v112 = vld [vmem:[#allocation5 + $0xd8] sm:$0xff]
    %v113 = vld [vmem:[#allocation5 + $0xe0] sm:$0xff]
    %v114 = vld [vmem:[#allocation5 + $0xe8] sm:$0xff]
    %v115 = vld [vmem:[#allocation5 + $0xf0] sm:$0xff]
    %v116 = vld [vmem:[#allocation5 + $0xf8] sm:$0xff]
    %117 = vmatprep.subr.mxu0 0.0
    %118 = vmatpush1.msra.mxu0 %v85
    %119 = vmatprep.subr.mxu0 0.0
    %120 = vmatpush1.msra.mxu0 %v86
    %121 = vmatprep.subr.mxu0 0.0
    %122 = vmatpush1.msra.mxu0 %v87
    %123 = vmatprep.subr.mxu0 0.0
    %124 = vmatpush1.msra.mxu0 %v88
    %125 = vmatprep.subr.mxu0 0.0
    %126 = vmatpush1.msra.mxu0 %v89
    %127 = vmatprep.subr.mxu0 0.0
    %128 = vmatpush1.msra.mxu0 %v90
    %129 = vmatprep.subr.mxu0 0.0
    %130 = vmatpush1.msra.mxu0 %v91
    %131 = vmatprep.subr.mxu0 0.0
    %132 = vmatpush1.msra.mxu0 %v92
    %133 = vmatprep.subr.mxu0 0.0
    %134 = vmatpush1.msra.mxu0 %v93
    %135 = vmatprep.subr.mxu0 0.0
    %136 = vmatpush1.msra.mxu0 %v94
    %137 = vmatprep.subr.mxu0 0.0
    %138 = vmatpush1.msra.mxu0 %v95
    %139 = vmatprep.subr.mxu0 0.0
    %140 = vmatpush1.msra.mxu0 %v96
    %141 = vmatprep.subr.mxu0 0.0
    %142 = vmatpush1.msra.mxu0 %v97
    %143 = vmatprep.subr.mxu0 0.0
    %144 = vmatpush1.msra.mxu0 %v98
    %145 = vmatprep.subr.mxu0 0.0
    %146 = vmatpush1.msra.mxu0 %v99
    %147 = vmatprep.subr.mxu0 0.0
    %148 = vmatpush1.msra.mxu0 %v100
    %149 = vmatprep.subr.mxu0 0.0
    %150 = vmatpush1.msra.mxu0 %v101
    %151 = vmatprep.subr.mxu0 0.0
    %152 = vmatpush1.msra.mxu0 %v102
    %153 = vmatprep.subr.mxu0 0.0
    %154 = vmatpush1.msra.mxu0 %v103
    %155 = vmatprep.subr.mxu0 0.0
    %156 = vmatpush1.msra.mxu0 %v104
    %157 = vmatprep.subr.mxu0 0.0
    %158 = vmatpush1.msra.mxu0 %v105
    %159 = vmatprep.subr.mxu0 0.0
    %160 = vmatpush1.msra.mxu0 %v106
    %161 = vmatprep.subr.mxu0 0.0
    %162 = vmatpush1.msra.mxu0 %v107
    %163 = vmatprep.subr.mxu0 0.0
    %164 = vmatpush1.msra.mxu0 %v108
    %165 = vmatprep.subr.mxu0 0.0
    %166 = vmatpush1.msra.mxu0 %v109
    %167 = vmatprep.subr.mxu0 0.0
    %168 = vmatpush1.msra.mxu0 %v110
    %169 = vmatprep.subr.mxu0 0.0
    %170 = vmatpush1.msra.mxu0 %v111
    %171 = vmatprep.subr.mxu0 0.0
    %172 = vmatpush1.msra.mxu0 %v112
    %173 = vmatprep.subr.mxu0 0.0
    %174 = vmatpush1.msra.mxu0 %v113
    %175 = vmatprep.subr.mxu0 0.0
    %176 = vmatpush1.msra.mxu0 %v114
    %177 = vmatprep.subr.mxu0 0.0
    %178 = vmatpush1.msra.mxu0 %v115
    %179 = vmatprep.subr.mxu0 0.0
    %180 = vmatpush1.msra.mxu0 %v116
    %181 = vmatprep.mubr.f32.mxu0 %v70
    %182 = vmatmul.mubr.f32.gmra.mrb[0].mxu0 %v69
    %v183 = vpop.f32.mrb[0].mxu0
    %v184 = vadd.f32 0.0, %v183
    %v185 = vpop.f32.mrb[0].mxu0
    %186 = vmatprep.mubr.f32.mxu0 %v72
    %187 = vmatmul.mubr.f32.gmra.mrb[0].mxu0 %v71
    %v188 = vpop.f32.mrb[0].mxu0
    %v189 = vadd.f32 0.0, %v188
    %v190 = vpop.f32.mrb[0].mxu0
    %191 = vmatprep.mubr.f32.mxu0 %v74
    %192 = vmatmul.mubr.f32.gmra.mrb[0].mxu0 %v73
    %v193 = vpop.f32.mrb[0].mxu0
    %v194 = vadd.f32 0.0, %v193
    %v195 = vpop.f32.mrb[0].mxu0
    %196 = vmatprep.mubr.f32.mxu0 %v76
    %197 = vmatmul.mubr.f32.gmra.mrb[0].mxu0 %v75
    %v198 = vpop.f32.mrb[0].mxu0
    %v199 = vadd.f32 0.0, %v198
    %v200 = vpop.f32.mrb[0].mxu0
    %201 = vmatprep.mubr.f32.mxu0 %v78
    %202 = vmatmul.mubr.f32.gmra.mrb[0].mxu0 %v77
    %v203 = vpop.f32.mrb[0].mxu0
    %v204 = vadd.f32 0.0, %v203
    %v205 = vpop.f32.mrb[0].mxu0
    %206 = vmatprep.mubr.f32.mxu0 %v80
    %207 = vmatmul.mubr.f32.gmra.mrb[0].mxu0 %v79
    %v208 = vpop.f32.mrb[0].mxu0
    %v209 = vadd.f32 0.0, %v208
    %v210 = vpop.f32.mrb[0].mxu0
    %211 = vmatprep.mubr.f32.mxu0 %v82
    %212 = vmatmul.mubr.f32.gmra.mrb[0].mxu0 %v81
    %v213 = vpop.f32.mrb[0].mxu0
    %v214 = vadd.f32 0.0, %v213
    %v215 = vpop.f32.mrb[0].mxu0
    %216 = vmatprep.mubr.f32.mxu0 %v84
    %217 = vmatmul.mubr.f32.gmra.mrb[0].mxu0 %v83
    %v218 = vpop.f32.mrb[0].mxu0
    %v219 = vadd.f32 0.0, %v218
    %v220 = vpop.f32.mrb[0].mxu0
    %221 = vdwg.mxu0
    %v222 = vadd.f32 %v184, %v189
    %v223 = vadd.f32 %v222, %v194
    %v224 = vadd.f32 %v223, %v199
    %v225 = vadd.f32 %v224, %v204
    %v226 = vadd.f32 %v225, %v209
    %v227 = vadd.f32 %v226, %v214
    %v228 = vadd.f32 %v227, %v219
    %v229 = vrot.slane %v228, 4
    %v230 = vadd.f32 %v228, %v229
    %v231 = vrot.slane %v230, 2
    %v232 = vadd.f32 %v230, %v231
    %v233 = vrot.slane %v232, 1
    %v234 = vadd.f32 %v232, %v233
    %v235 = vrcp.pop 64.0
    %v236 = vmul.f32 %v234, %v235
    %v237 = vsub.f32 %v184, %v236
    %v238 = vsub.f32 %v189, %v236
    %v239 = vsub.f32 %v194, %v236
    %v240 = vsub.f32 %v199, %v236
    %v241 = vsub.f32 %v204, %v236
    %v242 = vsub.f32 %v209, %v236
    %v243 = vsub.f32 %v214, %v236
    %v244 = vsub.f32 %v219, %v236
    %v245 = vmul.f32 %v237, %v237
    %v246 = vmul.f32 %v238, %v238
    %v247 = vmul.f32 %v239, %v239
    %v248 = vmul.f32 %v240, %v240
    %v249 = vmul.f32 %v241, %v241
    %v250 = vmul.f32 %v242, %v242
    %v251 = vmul.f32 %v243, %v243
    %v252 = vmul.f32 %v244, %v244
    %v253 = vadd.f32 %v245, %v246
    %v254 = vadd.f32 %v253, %v247
    %v255 = vadd.f32 %v254, %v248
    %v256 = vadd.f32 %v255, %v249
    %v257 = vadd.f32 %v256, %v250
    %v258 = vadd.f32 %v257, %v251
    %v259 = vadd.f32 %v258, %v252
    %v260 = vrot.slane %v259, 4
    %v261 = vadd.f32 %v259, %v260
    %v262 = vrot.slane %v261, 2
    %v263 = vadd.f32 %v261, %v262
    %v264 = vrot.slane %v263, 1
    %v265 = vadd.f32 %v263, %v264
    %v266 = vmul.f32 %v265, %v235
    %v267 = vadd.f32 %v266, 1e-05
    %v268 = vrsqrt.pop %v267
    %v269 = vld [vmem:[#allocation7] sm:$0x1]
    %v270 = vmul.f32 %v268, %v269
    %v271 = vld [vmem:[#allocation8] sm:$0x1]
    %v272 = vmul.f32 %v236, %v270
    %v273 = vsub.f32 %v271, %v272
    %v274 = vlaneseq
    %v275 = vshrl.u32 %v274, 7
    %v276 = vsub.s32 0, %v275
    %v277 = vrot.slane %v270, %v276
    %v278 = vmul.f32 %v184, %v277
    %v279 = vmul.f32 %v189, %v277
    %v280 = vmul.f32 %v194, %v277
    %v281 = vmul.f32 %v199, %v277
    %v282 = vmul.f32 %v204, %v277
    %v283 = vmul.f32 %v209, %v277
    %v284 = vmul.f32 %v214, %v277
    %v285 = vmul.f32 %v219, %v277
    %v287 = vlaneseq
    %v288 = vshrl.u32 %v287, 7
    %v289 = vsub.s32 0, %v288
    %v290 = vrot.slane %v273, %v289
    %v292 = vadd.f32 %v278, %v290
    %v293 = vadd.f32 %v279, %v290
    %v294 = vadd.f32 %v280, %v290
    %v295 = vadd.f32 %v281, %v290
    %v296 = vadd.f32 %v282, %v290
    %v297 = vadd.f32 %v283, %v290
    %v298 = vadd.f32 %v284, %v290
    %v299 = vadd.f32 %v285, %v290
    %300 = vst [vmem:[#allocation10] sm:$0xff] %v292
    %301 = vst [vmem:[#allocation10 + $0x8] sm:$0xff] %v293
    %302 = vst [vmem:[#allocation10 + $0x10] sm:$0xff] %v294
    %303 = vst [vmem:[#allocation10 + $0x18] sm:$0xff] %v295
    %304 = vst [vmem:[#allocation10 + $0x20] sm:$0xff] %v296
    %305 = vst [vmem:[#allocation10 + $0x28] sm:$0xff] %v297
    %306 = vst [vmem:[#allocation10 + $0x30] sm:$0xff] %v298
    %307 = vst [vmem:[#allocation10 + $0x38] sm:$0xff] %v299
    // Predicated region
    $region34: #{tpu_custom_call.1} parent=1 // pred_check
      _
    $region35: #{tpu_custom_call.1} parent=1 // pred_check_branch
      %309 = sbr.rel (0) target = $region37
    $region36: #{tpu_custom_call.1} parent=1 // pred_region
      %s311 = ssub.s32 1024, 1024
      %312 = vsyncadd [#allocation4], %s311
      %s313 = sshll.u32 [#allocation10], 4
      %s314 = int_to_ptr.vmem [resolvable:$true] %s313
      %319 = dma.vmem_to_hbm [thread:$0]  %s314, 1024, %s4, [#allocation4], 128, 128, 8
    $region37: #{tpu_custom_call.1} parent=1 // pred_fallthru
      _
    // Predicated region
    $region38: #{tpu_custom_call.1} parent=1 // pred_check
      _
    $region39: #{tpu_custom_call.1} parent=1 // pred_check_branch
      %321 = sbr.rel (0) target = $region41
    $region40: #{tpu_custom_call.1} parent=1 // pred_region
      %322 = dma.done [#allocation4], 1024
    $region41: #{tpu_custom_call.1} parent=1 // pred_fallthru
      _
    %323 = vsyncpa [#allocation3], 1
    %324 = vsyncpa [#allocation6], 1
    %325 = vsyncpa [#allocation9], 1
    %326 = vsyncpa [#allocation4], 1

</llo_original>
